<compile_context>
chip_gen: v5e
topology: v5e:2x2
jax: 0.10.0
libtpu: 0.0.40
codegen_flags: <defaults>
</compile_context>

<pallas_src>
import math

import jax
import jax.numpy as jnp
from jax.experimental import pallas as pl
from jax.experimental.pallas import tpu as pltpu

BN_EPS = 1e-5


def _selection_kernel(x_ref, w_ref, b_ref, o_ref):
    # Linear with BN + bias folded into (W', b'):  z = x @ W' + b'
    # bf16 operands, f32 accumulation on the MXU.
    z = jnp.dot(x_ref[...], w_ref[...], preferred_element_type=jnp.float32) + b_ref[...]
    # ReLU (Dropout(p=0) is identity).
    z = jnp.maximum(z, 0.0)
    # Softmax over the feature axis (== PyTorch dim=1). Exact division: the kernel
    # is bandwidth-bound, so the approximate reciprocal saves nothing but breaks
    # the rows-sum-to-1 property.
    m = jnp.max(z, axis=-1, keepdims=True)
    e = jnp.exp(z - m)
    denom = jnp.sum(e, axis=-1, keepdims=True)
    o_ref[...] = (e / denom).astype(o_ref.dtype)


def selection_network(x, w_t, b, gamma, beta, running_mean, running_var, *, block_rows=2048):
    """x: (B, D_in); w_t: (D_in, D_out); BN params: (1, D_out). Returns (B, D_out) f32."""
    B, D_in = x.shape
    D_out = w_t.shape[1]

    # ---- Fold BatchNorm1d (eval) + bias into the weights (trace time, once) ----
    scale = gamma * jax.lax.rsqrt(running_var + BN_EPS)                 # (1, D_out)
    w_eff = (w_t * scale).astype(jnp.bfloat16)                          # (D_in, D_out)
    b_eff = ((b - running_mean) * scale + beta).astype(jnp.float32)     # (1, D_out)
    x_bf16 = x.astype(jnp.bfloat16)                                     # halve x HBM read

    # ---- Batch tiling: multiple of 8 rows; cap tile so grid has >= 2 steps ----
    # (lets the "parallel" batch axis actually shard across v7x's two TensorCores;
    #  harmless on single-TC v5e/v6e).
    half = -(-B // 2)                                                   # cdiv(B, 2)
    tb = min(block_rows, ((half + 7) // 8) * 8)
    tb = max(8, tb)
    b_padded = ((B + tb - 1) // tb) * tb
    if b_padded != B:
        x_bf16 = jnp.pad(x_bf16, ((0, b_padded - B), (0, 0)))
    grid = (b_padded // tb,)

    out = pl.pallas_call(
        _selection_kernel,
        out_shape=jax.ShapeDtypeStruct((b_padded, D_out), jnp.float32),
        grid=grid,
        in_specs=[
            pl.BlockSpec((tb, D_in), lambda i: (i, 0)),      # x: tiled over batch
            pl.BlockSpec((D_in, D_out), lambda i: (0, 0)),   # W': resident across grid
            pl.BlockSpec((1, D_out), lambda i: (0, 0)),      # b': resident across grid
        ],
        # Output last dim == full D_out (no lane padding, no post-call lane slice).
        out_specs=pl.BlockSpec((tb, D_out), lambda i: (i, 0)),
        compiler_params=pltpu.CompilerParams(
            dimension_semantics=("parallel",),               # megacore / v7x 2nd TC
        ),
    )(x_bf16, w_eff, b_eff)

    # Drop batch-row padding only (at most tb-1 rows).
    return out[:B] if b_padded != B else out


def init_params(key, input_dims, output_dims):
    # nn.init.xavier_normal_: std = sqrt(2 / (fan_in + fan_out))
    std = math.sqrt(2.0 / (input_dims + output_dims))
    w = jax.random.normal(key, (output_dims, input_dims), dtype=jnp.float32) * std
    w_t = jnp.transpose(w)                                   # (D_in, D_out)
    b = jnp.zeros((1, output_dims), dtype=jnp.float32)       # nn.init.constant_(bias, 0)
    gamma = jnp.ones((1, output_dims), dtype=jnp.float32)    # BatchNorm1d defaults
    beta = jnp.zeros((1, output_dims), dtype=jnp.float32)
    running_mean = jnp.zeros((1, output_dims), dtype=jnp.float32)
    running_var = jnp.ones((1, output_dims), dtype=jnp.float32)
    return w_t, b, gamma, beta, running_mean, running_var


def _reference(x, w_t, b, gamma, beta, mean, var):
    z = x @ w_t + b
    z = (z - mean) / jnp.sqrt(var + BN_EPS) * gamma + beta
    z = jnp.maximum(z, 0.0)
    return jax.nn.softmax(z, axis=1)


if __name__ == "__main__":
    key = jax.random.PRNGKey(0)
    k_x, k_w = jax.random.split(key)

    B, input_dims, output_dims = 24, 32, 16
    x = jax.random.normal(k_x, (B, input_dims), dtype=jnp.float32)
    params = init_params(k_w, input_dims, output_dims)

    # With B=24 the tile caps at 16 rows -> grid=(2,), so the batch pipeline
    # (and the v7x parallel split) is actually exercised.
    out = selection_network(x, *params)
    out = jax.block_until_ready(out)

    ref = _reference(x, *params)
    assert out.shape == (B, output_dims)
    # bf16 matmul operands -> values match the f32 reference to ~1e-3; generous margin.
    assert jnp.allclose(out, ref, atol=2e-2, rtol=2e-2), "mismatch vs reference"
    # Exact softmax division -> rows sum to 1 within f32 rounding.
    assert jnp.allclose(jnp.sum(out, axis=1), 1.0, atol=1e-5), "softmax rows must sum to 1"

    print("KERNEL_OK")
</pallas_src>

<mosaic_0001>
module attributes {stable_mosaic.version = 11 : i64} {
  func.func @_selection_kernel(%arg0: i32, %arg1: memref<16x32xbf16, #tpu.memory_space<vmem>>, %arg2: memref<32x16xbf16, #tpu.memory_space<vmem>>, %arg3: memref<1x16xf32, #tpu.memory_space<vmem>>, %arg4: memref<16x16xf32, #tpu.memory_space<vmem>>) attributes {dimension_semantics = [#tpu.dimension_semantics<parallel>], iteration_bounds = array<i64: 2>, scalar_prefetch = 0 : i64, scratch_operands = 0 : i64, tpu.core_type = #tpu.core_type<tc>, window_params = [{transform_indices = @transform_0, window_bounds = array<i64: 16, 32>}, {pipeline_mode = #tpu.pipeline_mode<synchronous>, transform_indices = @transform_1, window_bounds = array<i64: 32, 16>}, {pipeline_mode = #tpu.pipeline_mode<synchronous>, transform_indices = @transform_2, window_bounds = array<i64: 1, 16>}, {transform_indices = @transform_3, window_bounds = array<i64: 16, 16>}]} {
    %c0 = arith.constant 0 : index
    %c0_0 = arith.constant 0 : index
    %0 = vector.load %arg1[%c0, %c0_0] : memref<16x32xbf16, #tpu.memory_space<vmem>>, vector<16x32xbf16>
    %c0_1 = arith.constant 0 : index
    %c0_2 = arith.constant 0 : index
    %1 = vector.load %arg2[%c0_1, %c0_2] : memref<32x16xbf16, #tpu.memory_space<vmem>>, vector<32x16xbf16>
    %cst = arith.constant dense<0.000000e+00> : vector<16x16xf32>
    %2 = tpu.matmul %0, %1, %cst {dimension_numbers = #tpu.dot_dimension_numbers<[1], [0], [0], [1], [0, 0, 1, 1], [], []>} : vector<16x32xbf16>, vector<32x16xbf16>, vector<16x16xf32> -> vector<16x16xf32>
    %c0_3 = arith.constant 0 : index
    %c0_4 = arith.constant 0 : index
    %3 = vector.load %arg3[%c0_3, %c0_4] : memref<1x16xf32, #tpu.memory_space<vmem>>, vector<1x16xf32>
    %4 = vector.broadcast %3 : vector<1x16xf32> to vector<16x16xf32>
    %5 = arith.addf %2, %4 : vector<16x16xf32>
    %cst_5 = arith.constant 0.000000e+00 : f32
    %6 = vector.broadcast %cst_5 : f32 to vector<16x16xf32>
    %7 = arith.maximumf %5, %6 : vector<16x16xf32>
    %cst_6 = arith.constant dense<0xFF800000> : vector<16xf32>
    %8 = vector.multi_reduction <maximumf>, %7, %cst_6 [1] : vector<16x16xf32> to vector<16xf32>
    %9 = vector.shape_cast %8 : vector<16xf32> to vector<16x1xf32>
    %10 = vector.broadcast %9 : vector<16x1xf32> to vector<16x16xf32>
    %11 = arith.subf %7, %10 : vector<16x16xf32>
    %12 = math.exp %11 : vector<16x16xf32>
    %cst_7 = arith.constant dense<0.000000e+00> : vector<16xf32>
    %13 = vector.multi_reduction <add>, %12, %cst_7 [1] : vector<16x16xf32> to vector<16xf32>
    %14 = vector.shape_cast %13 : vector<16xf32> to vector<16x1xf32>
    %15 = vector.broadcast %14 : vector<16x1xf32> to vector<16x16xf32>
    %16 = arith.divf %12, %15 : vector<16x16xf32>
    %c0_8 = arith.constant 0 : index
    %c0_9 = arith.constant 0 : index
    %17 = vector.load %arg4[%c0_8, %c0_9] : memref<16x16xf32, #tpu.memory_space<vmem>>, vector<16x16xf32>
    tpu.vector_store %arg4[%c0_8, %c0_9], %16 {strides = array<i32>} : memref<16x16xf32, #tpu.memory_space<vmem>>, vector<16x16xf32>,
    return
  }
  func.func @transform_0(%arg0: i32) -> (i32, i32) {
    %c0_i32 = arith.constant 0 : i32
    %c0_i32_0 = arith.constant 0 : i32
    return %arg0, %c0_i32 : i32, i32
  }
  func.func @transform_1(%arg0: i32) -> (i32, i32) {
    %c0_i32 = arith.constant 0 : i32
    %c0_i32_0 = arith.constant 0 : i32
    %c0_i32_1 = arith.constant 0 : i32
    return %c0_i32, %c0_i32_0 : i32, i32
  }
  func.func @transform_2(%arg0: i32) -> (i32, i32) {
    %c0_i32 = arith.constant 0 : i32
    %c0_i32_0 = arith.constant 0 : i32
    %c0_i32_1 = arith.constant 0 : i32
    return %c0_i32, %c0_i32_0 : i32, i32
  }
  func.func @transform_3(%arg0: i32) -> (i32, i32) {
    %c0_i32 = arith.constant 0 : i32
    %c0_i32_0 = arith.constant 0 : i32
    return %arg0, %c0_i32 : i32, i32
  }
}

</mosaic_0001>

<llo_original>
// kernel: tpu_custom_call.1
$region0: #{tpu_custom_call.1}
  #allocation0 [shape = 'u32[]', space=smem, size = 0x4, offset = 0x4, fixed_abs, tag = 'smem constant byte address 0x4 - core index']
  #allocation1 [shape = 'u32[72,128]{1,0:T(1,128)}', space=vmem, size = 0x9000, scoped, tag = 'internal scratch']
  %s0 = inlined_call_operand.vmem [shape: bf16[32,32], index: 0, kind: input, shape index: {}]
  %s1 = inlined_call_operand.vmem [shape: bf16[32,16], index: 1, kind: input, shape index: {}]
  %s2 = inlined_call_operand.vmem [shape: f32[1,16], index: 2, kind: input, shape index: {}]
  %s3 = inlined_call_operand.vmem [shape: f32[32,16], index: 3, kind: output, shape index: {}]
  %s4 = sld [smem:[#allocation0]]
  $region45: #{tpu_custom_call.1} parent=0
    _
  %s6 = ssub.s32 1, %s4
  %s7 = scalar_select 0, %s6, %s4
  loop: start=0, step=1, limit=4
  $region2: #{tpu_custom_call.1} parent=0 // loop_pre_header
    _
  $region3: #{tpu_custom_call.1} parent=0 // loop_header
    %s9 = sphi 0, %s13
    %p10 = scmp.ge.s32.totalorder %s9, 4
    %s19 = sphi 0, %s21
    %s22 = sphi 0, %s19
    %s23 = sphi 0, %s22
    %s39 = sphi 0, %s23
    %s43 = sphi 0, %s43
    %s45 = sphi 0, %s43
    %s46 = sphi 0, %s45
    %s60 = sphi 0, %s46
    %s64 = sphi 0, %s64
    %s66 = sphi 0, %s64
    %s67 = sphi 0, %s66
    %s81 = sphi 0, %s67
    %s87 = sphi 0, %s89
    %s90 = sphi 0, %s87
    %s91 = sphi 0, %s90
    %s107 = sphi 0, %s91
  $region4: #{tpu_custom_call.1} parent=0 // loop_header_branch
    %12 = sbr.rel (%p10) target = $region8
  $region5: #{tpu_custom_call.1} parent=0 // loop_body
    %s14 = ssub.s32 %s9, 1
    %s15 = ssub.s32 %s9, 2
    %s16 = sadd.s32 %s9, 1
    %s17 = ssub.s32 %s9, %s16
    %p18 = scmp.eq.s32.totalorder %s17, 0
    %s20 = sadd.s32 %s19, 1
    %s21 = scalar_select %p18, %s19, %s20
    %p24 = pneg %p18
    %p25 = scmp.eq.s32.totalorder %s9, 1
    %p26 = por %p24, %p25
    %p27 = scmp.ne.s32.totalorder %s19, %s22
    %p28 = scmp.eq.s32.totalorder %s9, 0
    %p29 = por %p27, %p28
    %p30 = scmp.ne.s32.totalorder %s19, %s22
    %p31 = scmp.eq.s32.totalorder %s14, 1
    %p32 = por %p30, %p31
    %p33 = scmp.ne.s32.totalorder %s22, %s23
    %p34 = scmp.eq.s32.totalorder %s14, 0
    %p35 = por %p33, %p34
    %p36 = scmp.ne.s32.totalorder %s22, %s23
    %p37 = scmp.eq.s32.totalorder %s15, 1
    %p38 = por %p36, %p37
    %p40 = scmp.ne.s32.totalorder %s23, %s39
    %p41 = scmp.eq.s32.totalorder %s15, 0
    %p42 = por %p40, %p41
    %s44 = sadd.s32 %s43, 1
    %p47 = scmp.eq.s32.totalorder %s9, 1
    %p48 = scmp.ne.s32.totalorder %s43, %s45
    %p49 = scmp.eq.s32.totalorder %s9, 0
    %p50 = por %p48, %p49
    %p51 = scmp.ne.s32.totalorder %s43, %s45
    %p52 = scmp.eq.s32.totalorder %s14, 1
    %p53 = por %p51, %p52
    %p54 = scmp.ne.s32.totalorder %s45, %s46
    %p55 = scmp.eq.s32.totalorder %s14, 0
    %p56 = por %p54, %p55
    %p57 = scmp.ne.s32.totalorder %s45, %s46
    %p58 = scmp.eq.s32.totalorder %s15, 1
    %p59 = por %p57, %p58
    %p61 = scmp.ne.s32.totalorder %s46, %s60
    %p62 = scmp.eq.s32.totalorder %s15, 0
    %p63 = por %p61, %p62
    %s65 = sadd.s32 %s64, 1
    %p68 = scmp.eq.s32.totalorder %s9, 1
    %p69 = scmp.ne.s32.totalorder %s64, %s66
    %p70 = scmp.eq.s32.totalorder %s9, 0
    %p71 = por %p69, %p70
    %p72 = scmp.ne.s32.totalorder %s64, %s66
    %p73 = scmp.eq.s32.totalorder %s14, 1
    %p74 = por %p72, %p73
    %p75 = scmp.ne.s32.totalorder %s66, %s67
    %p76 = scmp.eq.s32.totalorder %s14, 0
    %p77 = por %p75, %p76
    %p78 = scmp.ne.s32.totalorder %s66, %s67
    %p79 = scmp.eq.s32.totalorder %s15, 1
    %p80 = por %p78, %p79
    %p82 = scmp.ne.s32.totalorder %s67, %s81
    %p83 = scmp.eq.s32.totalorder %s15, 0
    %p84 = por %p82, %p83
    %s85 = ssub.s32 %s9, %s16
    %p86 = scmp.eq.s32.totalorder %s85, 0
    %s88 = sadd.s32 %s87, 1
    %s89 = scalar_select %p86, %s87, %s88
    %p92 = pneg %p86
    %p93 = scmp.eq.s32.totalorder %s9, 1
    %p94 = por %p92, %p93
    %p95 = scmp.ne.s32.totalorder %s87, %s90
    %p96 = scmp.eq.s32.totalorder %s9, 0
    %p97 = por %p95, %p96
    %p98 = scmp.ne.s32.totalorder %s87, %s90
    %p99 = scmp.eq.s32.totalorder %s14, 1
    %p100 = por %p98, %p99
    %p101 = scmp.ne.s32.totalorder %s90, %s91
    %p102 = scmp.eq.s32.totalorder %s14, 0
    %p103 = por %p101, %p102
    %p104 = scmp.ne.s32.totalorder %s90, %s91
    %p105 = scmp.eq.s32.totalorder %s15, 1
    %p106 = por %p104, %p105
    %p108 = scmp.ne.s32.totalorder %s91, %s107
    %p109 = scmp.eq.s32.totalorder %s15, 0
    %p110 = por %p108, %p109
    %p111 = scmp.le.s32.totalorder 1, %s9
    %p112 = scmp.lt.s32.totalorder %s9, 3
    %p113 = pnand %p111, %p112
    %p114 = pneg %p113
    // Predicated region
    $region9: #{tpu_custom_call.1} parent=5 // pred_check
      _
    $region10: #{tpu_custom_call.1} parent=5 // pred_check_branch
      %116 = sbr.rel (%p113) target = $region12
    $region11: #{tpu_custom_call.1} parent=5 // pred_region
      %s117 = ssub.s32 %s9, 1
      // Predicated region
      $region13: #{tpu_custom_call.1} parent=11 // pred_check
        %p118 = pneg %p56
      $region14: #{tpu_custom_call.1} parent=11 // pred_check_branch
        %120 = sbr.rel (%p118) target = $region16
      $region15: #{tpu_custom_call.1} parent=11 // pred_region
        _
      $region16: #{tpu_custom_call.1} parent=11 // pred_fallthru
        _
      // Predicated region
      $region17: #{tpu_custom_call.1} parent=11 // pred_check
        %p121 = pneg %p77
      $region18: #{tpu_custom_call.1} parent=11 // pred_check_branch
        %123 = sbr.rel (%p121) target = $region20
      $region19: #{tpu_custom_call.1} parent=11 // pred_region
        _
      $region20: #{tpu_custom_call.1} parent=11 // pred_fallthru
        _
    $region12: #{tpu_custom_call.1} parent=5 // pred_fallthru
      _
    %p124 = scmp.lt.s32.totalorder %s9, 2
    // Predicated region
    $region21: #{tpu_custom_call.1} parent=5 // pred_check
      %p125 = pneg %p124
    $region22: #{tpu_custom_call.1} parent=5 // pred_check_branch
      %127 = sbr.rel (%p125) target = $region24
    $region23: #{tpu_custom_call.1} parent=5 // pred_region
      // Predicated region
      $region25: #{tpu_custom_call.1} parent=23 // pred_check
        %p128 = pneg %p29
      $region26: #{tpu_custom_call.1} parent=23 // pred_check_branch
        %130 = sbr.rel (%p128) target = $region28
      $region27: #{tpu_custom_call.1} parent=23 // pred_region
        %s131 = smul.u32 2, %s9
        %p132 = scmp.lt.s32.totalorder %s131, 3
        %s133 = scalar_select %p132, %s131, 3
        %s134 = smul.addr %s133, 4
        %s135 = scalar_lea.vmem %s0, %s134
        %s136 = smul.u32 2, %s9
      $region28: #{tpu_custom_call.1} parent=23 // pred_fallthru
        _
    $region24: #{tpu_custom_call.1} parent=5 // pred_fallthru
      _
    %p137 = scmp.le.s32.totalorder 1, %s9
    %p138 = scmp.lt.s32.totalorder %s9, 3
    %p139 = pnand %p137, %p138
    %p140 = pneg %p139
    // Predicated region
    $region29: #{tpu_custom_call.1} parent=5 // pred_check
      _
    $region30: #{tpu_custom_call.1} parent=5 // pred_check_branch
      %142 = sbr.rel (%p139) target = $region32
    $region31: #{tpu_custom_call.1} parent=5 // pred_region
      %s143 = ssub.s32 %s9, 1
      %s144 = smul.u32 2, %s14
      %p145 = scmp.lt.s32.totalorder %s144, 3
      %s146 = scalar_select %p145, %s144, 3
      %s147 = smul.addr %s146, 4
      %s148 = scalar_lea.vmem %s0, %s147
      %p149 = pneg %p35
      %p150 = pneg %p32
      %p151 = pneg %p56
      %p152 = pneg %p53
      %p153 = pneg %p77
      %p154 = pneg %p74
      %p155 = pneg %p103
      %p156 = pneg %p100
      %s157 = smul.u32 2, %s14
      %p158 = scmp.lt.s32.totalorder %s157, 3
      %s159 = scalar_select %p158, %s157, 3
      %s160 = smul.addr %s159, 8
      %s161 = scalar_lea.vmem %s3, %s160
      %s162 = smul.u32 2, %s14
      %p163 = scmp.lt.s32.totalorder %s162, 3
      %s164 = scalar_select %p163, %s162, 3
      %s165 = smul.addr %s164, 4
      %s166 = scalar_lea.vmem %s0, %s165
      %s167 = smul.u32 2, %s14
      %s168 = smul.u32 2, %s14
      %p169 = scmp.lt.s32.totalorder %s168, 3
      %s170 = scalar_select %p169, %s168, 3
      %s171 = smul.addr %s170, 8
      %s172 = scalar_lea.vmem %s3, %s171
      %s173 = smul.u32 2, %s14
      %v175 = vld [vmem:[%s166] sm:$0xf]
      %v176 = vld [vmem:[%s166 + $0x4] sm:$0xf]
      %v177 = vld [vmem:[%s1] sm:$0xf]
      %v178 = vld [vmem:[%s1 + $0x4] sm:$0xf]
      %v179 = vld [vmem:[%s1 + $0x8] sm:$0xf]
      %v180 = vld [vmem:[%s1 + $0xc] sm:$0xf]
      %v181 = vld [vmem:[%s2] sm:$0x1]
      %v183 = vperm.slane %v181, 0
      %v187 = vunpack.c.l.b16 %v175
      %v188 = vunpack.c.l.b16 %v176
      %v189 = vpack.c.b16 %v188, %v187
      %v194 = vunpack.c.l.b16 %v177
      %v195 = vunpack.c.l.b16 %v178
      %v196 = vunpack.c.l.b16 %v179
      %v197 = vunpack.c.l.b16 %v180
      %v198 = vpack.c.b16 %v195, %v194
      %v199 = vpack.c.b16 %v197, %v196
      %vm202 = vcmask 261120
      %v204 = vsel %vm202, %v189, 0
      %206 = vmatpush.bf16.msra.mxu0 0
      %207 = vmatpush.bf16.msra.mxu0 0
      %208 = vmatpush.bf16.msra.mxu0 0
      %209 = vmatpush.bf16.msra.mxu0 0
      %210 = vmatpush.bf16.msra.mxu0 0
      %211 = vmatpush.bf16.msra.mxu0 0
      %212 = vmatpush.bf16.msra.mxu0 %v199
      %213 = vmatpush.bf16.msra.mxu0 %v198
      %214 = vmatmul.bf16.gmra.mxu0 %v204
      %v215 = vpop.f32.mrf.mxu0
      %v216 = vadd.f32 %v183, %v215
      %v217 = vpop.f32.mrf.mxu0
      %v218 = vadd.f32 %v183, %v217
      %219 = vdwg.mxu0
      %v220 = vmax.f32 %v216, 0.0
      %v221 = vmax.f32 %v218, 0.0
      %vm222 = vcmask 130048
      %v223 = vsel %vm222, %v220, -inf
      %224 = vmax.xlane.f32.xlu0 %v223
      %v225 = vpop.xlane.xlu0 %224
      %v226 = vsel %vm222, %v221, -inf
      %227 = vmax.xlane.f32.xlu0 %v226
      %v228 = vpop.xlane.xlu0 %227
      %v229 = vsub.f32 %v220, %v225
      %v230 = vsub.f32 %v221, %v228
      %v231 = vmul.f32 %v229, 1.442695
      %v232 = vpow.pop %v231
      %v233 = vmul.f32 %v230, 1.442695
      %v234 = vpow.pop %v233
      %v235 = vsel %vm222, %v232, 0.0
      %236 = vadd.xlane.f32.xlu0 %v235
      %v237 = vpop.xlane.xlu0 %236
      %v238 = vsel %vm222, %v234, 0.0
      %239 = vadd.xlane.f32.xlu0 %v238
      %v240 = vpop.xlane.xlu0 %239
      %v241 = vrcp.pop %v237
      %v242 = vmul.f32 %v237, %v241
      %v243 = vsub.f32 1.0, %v242
      %v244 = vmul.f32 %v241, %v243
      %v245 = vadd.f32 %v241, %v244
      %vm246 = vweird.f32 %v237
      %vm247 = vweird.f32 %v241
      %vm248 = vmor %vm246, %vm247
      %v249 = vsel %vm248, %v241, %v245
      %v250 = vand.u32 2147483647, %v237
      %vm251 = vcmp.eq.f32.partialorder %v250, 8.507059e+37
      %v252 = vand.u32 %v237, 2147483648
      %v253 = vor.u32 1.1754944e-38, %v252
      %v254 = vsel %vm251, %v253, %v249
      %v255 = vmul.f32 %v232, %v254
      %v256 = vrcp.pop %v240
      %v257 = vmul.f32 %v240, %v256
      %v258 = vsub.f32 1.0, %v257
      %v259 = vmul.f32 %v256, %v258
      %v260 = vadd.f32 %v256, %v259
      %vm261 = vweird.f32 %v240
      %vm262 = vweird.f32 %v256
      %vm263 = vmor %vm261, %vm262
      %v264 = vsel %vm263, %v256, %v260
      %v265 = vand.u32 2147483647, %v240
      %vm266 = vcmp.eq.f32.partialorder %v265, 8.507059e+37
      %v267 = vand.u32 %v240, 2147483648
      %v268 = vor.u32 1.1754944e-38, %v267
      %v269 = vsel %vm266, %v268, %v264
      %v270 = vmul.f32 %v234, %v269
      %271 = vst.msk [vmem:[%s172] sm:$0xff] %vm222, %v255
      %272 = vst.msk [vmem:[%s172 + $0x8] sm:$0xff] %vm222, %v270
      %s273 = smul.u32 2, %s14
      %p274 = scmp.lt.s32.totalorder %s273, 3
      %s275 = scalar_select %p274, %s273, 3
      %s276 = smul.addr %s275, 8
      %s277 = scalar_lea.vmem %s3, %s276
      // Predicated region
      $region33: #{tpu_custom_call.1} parent=31 // pred_check
        %p278 = pneg %p100
      $region34: #{tpu_custom_call.1} parent=31 // pred_check_branch
        %280 = sbr.rel (%p278) target = $region36
      $region35: #{tpu_custom_call.1} parent=31 // pred_region
        %s281 = smul.u32 2, %s14
      $region36: #{tpu_custom_call.1} parent=31 // pred_fallthru
        _
    $region32: #{tpu_custom_call.1} parent=5 // pred_fallthru
      _
    %p282 = scmp.le.s32.totalorder 2, %s9
    // Predicated region
    $region37: #{tpu_custom_call.1} parent=5 // pred_check
      %p283 = pneg %p282
    $region38: #{tpu_custom_call.1} parent=5 // pred_check_branch
      %285 = sbr.rel (%p283) target = $region40
    $region39: #{tpu_custom_call.1} parent=5 // pred_region
      %s286 = ssub.s32 %s9, 2
      // Predicated region
      $region41: #{tpu_custom_call.1} parent=39 // pred_check
        %p287 = pneg %p106
      $region42: #{tpu_custom_call.1} parent=39 // pred_check_branch
        %289 = sbr.rel (%p287) target = $region44
      $region43: #{tpu_custom_call.1} parent=39 // pred_region
        %s290 = smul.u32 2, %s15
        %p291 = scmp.lt.s32.totalorder %s290, 3
        %s292 = scalar_select %p291, %s290, 3
        %s293 = smul.addr %s292, 8
        %s294 = scalar_lea.vmem %s3, %s293
      $region44: #{tpu_custom_call.1} parent=39 // pred_fallthru
        _
    $region40: #{tpu_custom_call.1} parent=5 // pred_fallthru
      _
  $region6: #{tpu_custom_call.1} parent=0 // loop_footer
    %s13 = sadd.s32 1, %s9
  $region7: #{tpu_custom_call.1} parent=0 // loop_footer_branch
    %8 = sbr.rel target = $region3
  $region8: #{tpu_custom_call.1} parent=0 // loop_exit
    _

</llo_original>
